<compile_context>
chip_gen: v6e
topology: v6e:2x2x1
jax: 0.10.0
libtpu: 0.0.40
codegen_flags: <defaults>
</compile_context>

<pallas_src>
import jax
import jax.numpy as jnp
from jax import lax
from jax.experimental import pallas as pl
from jax.experimental.pallas import tpu as pltpu

QUERY_TRANSFORM = "activation"   # "mean" (pass-through) or "activation" (Linear + Tanh)
# TODO(synk): Gs.Query.transform == Gsv.rnn raises NotImplementedError in the reference.

TQ = 8                       # queries per grid step (stage 1) -> sublane-dense (8, E) tiles
TB = 8                       # batch rows per grid step (stage 2)
_PREFETCH_K = 4              # bag-row prefetch depth for the HBM-vocab fallback
_RESIDENT_VOCAB_BUDGET = 24 << 20   # bytes; 2x (double-buffer) stays inside v7x's 64 MiB VMEM
# TODO(synk): bf16 tables would halve gather DMAs / double the residency budget; kept f32
# here so numerics match the PyTorch float32 module exactly.


# ------------------------- parameter initialization ------------------------

def xavier_uniform(key, shape):
    # torch.nn.init.xavier_uniform_ on a 2-D tensor: fan_out = shape[0], fan_in = shape[1]
    fan_out, fan_in = shape
    a = (6.0 / (fan_in + fan_out)) ** 0.5
    return jax.random.uniform(key, shape, jnp.float32, -a, a)


# --------------------- stage 1: per-query embedding kernel ------------------

def _finalize_query_block(mean_ref, wq_ref, bq_ref, out_ref):
    if QUERY_TRANSFORM == "activation":
        y = jnp.dot(mean_ref[...], wq_ref[...], preferred_element_type=jnp.float32)
        out_ref[...] = jnp.tanh(y + bq_ref[...])
    else:  # "mean": pass-through
        out_ref[...] = mean_ref[...]


def _query_kernel_resident(
    # scalar prefetch (SMEM)
    bag_ref, bag_start_ref, bag_len_ref,
    # inputs (all VMEM-resident)
    wvocab_ref, wq_ref, bq_ref,
    # output (TQ, E)
    out_ref,
    # scratch
    mean_ref,
):
    tq, E = out_ref.shape
    step = pl.program_id(0)
    for r in range(tq):                       # static unrolled loop over the query tile
        q = step * tq + r
        start = bag_start_ref[q]
        n = bag_len_ref[q]

        def body(t, acc):
            tok = bag_ref[start + t]          # token ids already include the +1 offset
            return acc + wvocab_ref[pl.ds(tok, 1), :]   # VMEM row load, no DMA

        acc = lax.fori_loop(0, n, body, jnp.zeros((1, E), jnp.float32))
        inv = jnp.where(n > 0, 1.0 / jnp.maximum(n.astype(jnp.float32), 1.0), 0.0)
        mean_ref[pl.ds(r, 1), :] = acc * inv  # empty bag -> zeros (PyTorch EmbeddingBag)

    _finalize_query_block(mean_ref, wq_ref, bq_ref, out_ref)


def _query_kernel_hbm(
    # scalar prefetch (SMEM)
    bag_ref, bag_start_ref, bag_len_ref,
    # inputs
    wq_ref, bq_ref, wvocab_hbm,
    # output (TQ, E)
    out_ref,
    # scratch
    mean_ref, row_buf, sem,
):
    tq, E = out_ref.shape
    K = row_buf.shape[0]
    LA = K - 1                                # lookahead: K-1 row DMAs kept in flight
    step = pl.program_id(0)

    def row_copy(start, t, slot):
        tok = bag_ref[start + t]
        return pltpu.make_async_copy(
            wvocab_hbm.at[pl.ds(tok, 1), :], row_buf.at[slot], sem.at[slot])

    for r in range(tq):
        q = step * tq + r
        start = bag_start_ref[q]
        n = bag_len_ref[q]

        @pl.loop(0, jnp.minimum(n, LA))       # warm-up: fill the prefetch pipeline
        def _(t):
            row_copy(start, t, t % K).start()

        def body(t, acc):
            # Issue fetch t+LA BEFORE waiting on token t (true overlap); its slot
            # ((t+LA) % K == (t-1) % K) was consumed at step t-1, so it is free.
            @pl.when(t + LA < n)
            def _():
                row_copy(start, t + LA, (t + LA) % K).start()
            # Wait with the exact same src slice / dst / sem that was started for token t.
            row_copy(start, t, t % K).wait()
            return acc + row_buf[t % K]

        acc = lax.fori_loop(0, n, body, jnp.zeros((1, E), jnp.float32))
        inv = jnp.where(n > 0, 1.0 / jnp.maximum(n.astype(jnp.float32), 1.0), 0.0)
        mean_ref[pl.ds(r, 1), :] = acc * inv

    _finalize_query_block(mean_ref, wq_ref, bq_ref, out_ref)


# ------------------- stage 2: batched row-gather kernel ---------------------

def _gather_kernel(
    # scalar prefetch (SMEM): per-batch-row indices
    u_idx_ref, i_idx_ref, q_idx_ref,
    # inputs (HBM, manual DMA)
    wuser_hbm, witem_hbm, qtab_hbm,
    # output (TB, 3E) merged slab
    out_ref,
    # scratch
    u_buf, q_buf, i_buf, sem,
):
    tb = out_ref.shape[0]
    step = pl.program_id(0)
    # NOTE: indices are assumed in-range; OOB DMAs are only bounds-checked at DMA level.
    copies = []
    for r in range(tb):                        # issue all 3*TB row DMAs first ...
        b = step * tb + r
        srcs = (wuser_hbm.at[pl.ds(u_idx_ref[b] + 1, 1), :],
                qtab_hbm.at[pl.ds(q_idx_ref[b], 1), :],
                witem_hbm.at[pl.ds(i_idx_ref[b] + 1, 1), :])
        dsts = (u_buf, q_buf, i_buf)
        for c in range(3):
            cp = pltpu.make_async_copy(srcs[c], dsts[c].at[pl.ds(r, 1), :], sem.at[c, r])
            cp.start()
            copies.append(cp)
    for cp in copies:                          # ... then wait (all latencies overlap)
        cp.wait()
    # one lane-merged writeback per step: [user | query | item]
    out_ref[...] = jnp.concatenate([u_buf[...], q_buf[...], i_buf[...]], axis=1)


# ------------------------------ EmbeddingLayer -----------------------------

class EmbeddingLayerPallas:
    def __init__(self, key, num_users, num_items, vocab_size,
                 queries_bag, queries_bag_offset, embedding_size):
        k1, k2, k3, k4, k5 = jax.random.split(key, 5)
        self.E = E = embedding_size
        self.num_users = num_users
        self.num_items = num_items
        self.vocab_size = vocab_size

        # nn.Embedding(len+1, E, padding_idx=0) followed by xavier_uniform_ (which
        # overwrites the whole weight, including row 0 — matching the PyTorch code).
        self.W_user = xavier_uniform(k1, (num_users + 1, E))
        self.W_item = xavier_uniform(k2, (num_items + 1, E))
        self.W_vocab = xavier_uniform(k3, (vocab_size + 1, E))
        # device copy of the vocab table padded to a sublane multiple (zero rows, never read)
        v_rows = vocab_size + 1
        v_pad = ((v_rows + 7) // 8) * 8
        self._W_vocab_dev = jnp.pad(self.W_vocab, ((0, v_pad - v_rows), (0, 0)))
        self.vocab_bytes = int(self._W_vocab_dev.size) * 4

        # query_transform = nn.Linear(E, E) + Tanh (PyTorch Linear default init)
        bound = 1.0 / (E ** 0.5)
        self.W_q = jax.random.uniform(k4, (E, E), jnp.float32, -bound, bound)
        self.b_q = jax.random.uniform(k5, (E,), jnp.float32, -bound, bound)
        self.W_q_T = jnp.asarray(self.W_q.T)          # kernel computes mean @ W_q^T + b
        self.b_q_row = self.b_q.reshape(1, E)

        # EmbeddingBag CSR description, padded to a multiple of TQ queries (padded
        # queries have length 0 -> zero mean; their output rows are never gathered).
        L = int(queries_bag.shape[0])
        Q = int(queries_bag_offset.shape[0])
        q_pad = ((Q + TQ - 1) // TQ) * TQ
        starts = queries_bag_offset.astype(jnp.int32)
        lens = jnp.diff(jnp.concatenate([starts, jnp.array([L], jnp.int32)]))
        self.bag = queries_bag.astype(jnp.int32)
        self.bag_start = jnp.pad(starts, (0, q_pad - Q))
        self.bag_len = jnp.pad(lens, (0, q_pad - Q))
        self.num_queries = Q
        self.num_queries_padded = q_pad

    # -- stage 1: embed every query once (same as the PyTorch reference) ------
    def _compute_query_table(self, force_hbm=False):
        E = self.E
        q_pad = self.num_queries_padded
        grid = (q_pad // TQ,)
        use_resident = (not force_hbm) and (self.vocab_bytes <= _RESIDENT_VOCAB_BUDGET)

        if use_resident:
            v_rows = self._W_vocab_dev.shape[0]
            grid_spec = pltpu.PrefetchScalarGridSpec(
                num_scalar_prefetch=3, grid=grid,
                in_specs=[
                    pl.BlockSpec((v_rows, E), lambda i, *_: (0, 0)),  # W_vocab resident
                    pl.BlockSpec((E, E), lambda i, *_: (0, 0)),       # W_q^T resident
                    pl.BlockSpec((1, E), lambda i, *_: (0, 0)),       # bias resident
                ],
                out_specs=pl.BlockSpec((TQ, E), lambda i, *_: (i, 0)),
                scratch_shapes=[pltpu.VMEM((TQ, E), jnp.float32)],
            )
            kernel = _query_kernel_resident
            args = (self.bag, self.bag_start, self.bag_len,
                    self._W_vocab_dev, self.W_q_T, self.b_q_row)
            vmem_limit = int(min(max(2 * self.vocab_bytes + (4 << 20), 16 << 20), 56 << 20))
            params = pltpu.CompilerParams(dimension_semantics=("parallel",),
                                          vmem_limit_bytes=vmem_limit)
        else:
            grid_spec = pltpu.PrefetchScalarGridSpec(
                num_scalar_prefetch=3, grid=grid,
                in_specs=[
                    pl.BlockSpec((E, E), lambda i, *_: (0, 0)),       # W_q^T resident
                    pl.BlockSpec((1, E), lambda i, *_: (0, 0)),       # bias resident
                    pl.BlockSpec(memory_space=pl.ANY),                # W_vocab stays in HBM
                ],
                out_specs=pl.BlockSpec((TQ, E), lambda i, *_: (i, 0)),
                scratch_shapes=[pltpu.VMEM((TQ, E), jnp.float32),
                                pltpu.VMEM((_PREFETCH_K, 1, E), jnp.float32),
                                pltpu.SemaphoreType.DMA((_PREFETCH_K,))],
            )
            kernel = _query_kernel_hbm
            args = (self.bag, self.bag_start, self.bag_len,
                    self.W_q_T, self.b_q_row, self._W_vocab_dev)
            params = pltpu.CompilerParams(dimension_semantics=("parallel",))

        return pl.pallas_call(
            kernel,
            out_shape=jax.ShapeDtypeStruct((q_pad, E), jnp.float32),
            grid_spec=grid_spec,
            compiler_params=params,
        )(*args)

    # -- full forward ---------------------------------------------------------
    def forward(self, user_indices, query_indices, item_indices, *, force_hbm_vocab=False):
        # TODO(synk): the `indices is None` branch of the reference (embedding the whole
        # one-hot dataset) is not implemented; pass explicit index vectors.
        # TODO(synk): Gs.Debug embedding_info side channel not reproduced.
        E = self.E
        B = int(user_indices.shape[0])
        assert query_indices.shape[0] == B and item_indices.shape[0] == B, \
            "fused kernel assumes equal-length index vectors"

        # Stage 1: deduplicated per-query EmbeddingBag(mean) (+ Linear + Tanh).
        q_table = self._compute_query_table(force_hbm=force_hbm_vocab)

        # Stage 2: batched row gather, TB rows per grid step, merged (TB, 3E) writeback.
        b_pad = ((B + TB - 1) // TB) * TB

        def pad_idx(x):
            x = x.astype(jnp.int32)
            return jnp.pad(x, (0, b_pad - B))   # padded rows gather valid row 0 / 1

        u_idx, i_idx, q_idx = pad_idx(user_indices), pad_idx(item_indices), pad_idx(query_indices)

        grid_spec = pltpu.PrefetchScalarGridSpec(
            num_scalar_prefetch=3, grid=(b_pad // TB,),
            in_specs=[pl.BlockSpec(memory_space=pl.ANY),   # W_user (HBM, row DMAs)
                      pl.BlockSpec(memory_space=pl.ANY),   # W_item (HBM, row DMAs)
                      pl.BlockSpec(memory_space=pl.ANY)],  # q_table (HBM, row DMAs)
            out_specs=pl.BlockSpec((TB, 3 * E), lambda s, *_: (s, 0)),
            scratch_shapes=[pltpu.VMEM((TB, E), jnp.float32),
                            pltpu.VMEM((TB, E), jnp.float32),
                            pltpu.VMEM((TB, E), jnp.float32),
                            pltpu.SemaphoreType.DMA((3, TB))],
        )
        fused = pl.pallas_call(
            _gather_kernel,
            out_shape=jax.ShapeDtypeStruct((b_pad, 3 * E), jnp.float32),
            grid_spec=grid_spec,
            compiler_params=pltpu.CompilerParams(dimension_semantics=("parallel",)),
        )(u_idx, i_idx, q_idx, self.W_user, self.W_item, q_table)

        u_emb = fused[:B, 0:E]
        q_emb = fused[:B, E:2 * E]
        i_emb = fused[:B, 2 * E:3 * E]
        return u_emb, q_emb, i_emb


# ----------------------------------- main -----------------------------------

if __name__ == "__main__":
    E = 32
    NUM_USERS, NUM_ITEMS, VOCAB = 6, 10, 12
    B = 16   # two grid steps of TB=8 -> both TensorCores get work on v7x

    # deterministic synthetic "dataset" bags (token ids index rows 1..VOCAB of the table);
    # bag #3 is empty to exercise the empty-bag path.
    queries_bag = jnp.array([1, 2, 3, 4, 5, 6, 7, 8, 9, 10, 11, 12, 1, 2], jnp.int32)
    queries_bag_offset = jnp.array([0, 3, 5, 9, 9], jnp.int32)   # 5 queries

    key = jax.random.PRNGKey(0)
    kp, ku, kq, ki = jax.random.split(key, 4)

    layer = EmbeddingLayerPallas(kp, NUM_USERS, NUM_ITEMS, VOCAB,
                                 queries_bag, queries_bag_offset, E)

    user_indices = jax.random.randint(ku, (B,), 0, NUM_USERS, dtype=jnp.int32)
    query_indices = jax.random.randint(kq, (B,), 0, layer.num_queries, dtype=jnp.int32)
    item_indices = jax.random.randint(ki, (B,), 0, NUM_ITEMS, dtype=jnp.int32)

    u_emb, q_emb, i_emb = layer.forward(user_indices, query_indices, item_indices)
    jax.block_until_ready((u_emb, q_emb, i_emb))

    # also exercise the HBM-vocab fallback (K-deep prefetch) and check it matches the
    # VMEM-resident path
    qtab_res = layer._compute_query_table(force_hbm=False)
    qtab_hbm = layer._compute_query_table(force_hbm=True)
    jax.block_until_ready((qtab_res, qtab_hbm))
    assert jnp.allclose(qtab_res, qtab_hbm, atol=1e-5, rtol=1e-5)

    # ---- pure-JAX reference (dense multihot used ONLY for checking, never in kernels) ----
    ref_u = layer.W_user[user_indices + 1]
    ref_i = layer.W_item[item_indices + 1]
    Lb = queries_bag.shape[0]
    Q = queries_bag_offset.shape[0]
    pos = jnp.arange(Lb)
    bag_id = jnp.sum(pos[:, None] >= queries_bag_offset[None, :], axis=1) - 1
    counts = jnp.zeros((Q, VOCAB + 1), jnp.float32).at[bag_id, queries_bag].add(1.0)
    lengths = jnp.diff(jnp.concatenate([queries_bag_offset,
                                        jnp.array([Lb], jnp.int32)])).astype(jnp.float32)
    multihot = counts / jnp.maximum(lengths, 1.0)[:, None]
    ref_q = (multihot @ layer.W_vocab)[query_indices]
    if QUERY_TRANSFORM == "activation":
        ref_q = jnp.tanh(ref_q @ layer.W_q.T + layer.b_q)

    assert u_emb.shape == (B, E) and q_emb.shape == (B, E) and i_emb.shape == (B, E)
    assert jnp.allclose(u_emb, ref_u, atol=1e-6, rtol=1e-6)
    assert jnp.allclose(i_emb, ref_i, atol=1e-6, rtol=1e-6)
    assert jnp.allclose(q_emb, ref_q, atol=1e-4, rtol=1e-4)

    print("KERNEL_OK")
</pallas_src>

<mosaic_0001>
module attributes {stable_mosaic.version = 11 : i64} {
  func.func @_query_kernel_resident(%arg0: i32, %arg1: memref<14xi32, #tpu.memory_space<smem>>, %arg2: memref<8xi32, #tpu.memory_space<smem>>, %arg3: memref<8xi32, #tpu.memory_space<smem>>, %arg4: memref<16x32xf32, #tpu.memory_space<vmem>>, %arg5: memref<32x32xf32, #tpu.memory_space<vmem>>, %arg6: memref<1x32xf32, #tpu.memory_space<vmem>>, %arg7: memref<8x32xf32, #tpu.memory_space<vmem>>, %arg8: memref<8x32xf32, #tpu.memory_space<vmem>>) attributes {dimension_semantics = [#tpu.dimension_semantics<parallel>], iteration_bounds = array<i64: 1>, scalar_prefetch = 3 : i64, scratch_operands = 1 : i64, tpu.core_type = #tpu.core_type<tc>, window_params = [{pipeline_mode = #tpu.pipeline_mode<synchronous>, transform_indices = @transform_0, window_bounds = array<i64: 16, 32>}, {pipeline_mode = #tpu.pipeline_mode<synchronous>, transform_indices = @transform_1, window_bounds = array<i64: 32, 32>}, {pipeline_mode = #tpu.pipeline_mode<synchronous>, transform_indices = @transform_2, window_bounds = array<i64: 1, 32>}, {transform_indices = @transform_3, window_bounds = array<i64: 8, 32>}]} {
    %c8_i32 = arith.constant 8 : i32
    %0 = arith.muli %arg0, %c8_i32 : i32
    %c0_i32 = arith.constant 0 : i32
    %1 = arith.addi %0, %c0_i32 : i32
    %2 = arith.index_cast %1 : i32 to index
    %3 = memref.load %arg2[%2] : memref<8xi32, #tpu.memory_space<smem>>
    %4 = arith.index_cast %1 : i32 to index
    %5 = memref.load %arg3[%4] : memref<8xi32, #tpu.memory_space<smem>>
    %cst = arith.constant 0.000000e+00 : f32
    %6 = vector.broadcast %cst : f32 to vector<1x32xf32>
    %c0_i32_0 = arith.constant 0 : i32
    %7 = arith.subi %5, %c0_i32_0 : i32
    %8 = arith.addi %c0_i32_0, %7 : i32
    %c1_i32 = arith.constant 1 : i32
    %9 = scf.for %arg9 = %c0_i32_0 to %8 step %c1_i32 iter_args(%arg10 = %6) -> (vector<1x32xf32>)  : i32 {
      %152 = arith.addi %3, %arg9 : i32
      %153 = arith.index_cast %152 : i32 to index
      %154 = memref.load %arg1[%153] : memref<14xi32, #tpu.memory_space<smem>>
      %155 = arith.index_cast %154 : i32 to index
      %c0_79 = arith.constant 0 : index
      %156 = vector.load %arg4[%155, %c0_79] : memref<16x32xf32, #tpu.memory_space<vmem>>, vector<1x32xf32>
      %157 = arith.addf %arg10, %156 : vector<1x32xf32>
      scf.yield %157 : vector<1x32xf32>
    }
    %c0_i32_1 = arith.constant 0 : i32
    %10 = arith.cmpi sgt, %5, %c0_i32_1 : i32
    %11 = arith.sitofp %5 : i32 to f32
    %cst_2 = arith.constant 1.000000e+00 : f32
    %12 = arith.maximumf %11, %cst_2 : f32
    %cst_3 = arith.constant 1.000000e+00 : f32
    %13 = arith.divf %cst_3, %12 : f32
    %cst_4 = arith.constant 0.000000e+00 : f32
    %14 = arith.select %10, %13, %cst_4 : f32
    %15 = vector.broadcast %14 : f32 to vector<1x32xf32>
    %16 = arith.mulf %9, %15 : vector<1x32xf32>
    %c0 = arith.constant 0 : index
    %c0_5 = arith.constant 0 : index
    %17 = vector.load %arg8[%c0, %c0_5] : memref<8x32xf32, #tpu.memory_space<vmem>>, vector<1x32xf32>
    tpu.vector_store %arg8[%c0, %c0_5], %16 {strides = array<i32>} : memref<8x32xf32, #tpu.memory_space<vmem>>, vector<1x32xf32>,
    %c8_i32_6 = arith.constant 8 : i32
    %18 = arith.muli %arg0, %c8_i32_6 : i32
    %c1_i32_7 = arith.constant 1 : i32
    %19 = arith.addi %18, %c1_i32_7 : i32
    %20 = arith.index_cast %19 : i32 to index
    %21 = memref.load %arg2[%20] : memref<8xi32, #tpu.memory_space<smem>>
    %22 = arith.index_cast %19 : i32 to index
    %23 = memref.load %arg3[%22] : memref<8xi32, #tpu.memory_space<smem>>
    %cst_8 = arith.constant 0.000000e+00 : f32
    %24 = vector.broadcast %cst_8 : f32 to vector<1x32xf32>
    %c0_i32_9 = arith.constant 0 : i32
    %25 = arith.subi %23, %c0_i32_9 : i32
    %26 = arith.addi %c0_i32_9, %25 : i32
    %c1_i32_10 = arith.constant 1 : i32
    %27 = scf.for %arg9 = %c0_i32_9 to %26 step %c1_i32_10 iter_args(%arg10 = %24) -> (vector<1x32xf32>)  : i32 {
      %152 = arith.addi %21, %arg9 : i32
      %153 = arith.index_cast %152 : i32 to index
      %154 = memref.load %arg1[%153] : memref<14xi32, #tpu.memory_space<smem>>
      %155 = arith.index_cast %154 : i32 to index
      %c0_79 = arith.constant 0 : index
      %156 = vector.load %arg4[%155, %c0_79] : memref<16x32xf32, #tpu.memory_space<vmem>>, vector<1x32xf32>
      %157 = arith.addf %arg10, %156 : vector<1x32xf32>
      scf.yield %157 : vector<1x32xf32>
    }
    %c0_i32_11 = arith.constant 0 : i32
    %28 = arith.cmpi sgt, %23, %c0_i32_11 : i32
    %29 = arith.sitofp %23 : i32 to f32
    %cst_12 = arith.constant 1.000000e+00 : f32
    %30 = arith.maximumf %29, %cst_12 : f32
    %cst_13 = arith.constant 1.000000e+00 : f32
    %31 = arith.divf %cst_13, %30 : f32
    %cst_14 = arith.constant 0.000000e+00 : f32
    %32 = arith.select %28, %31, %cst_14 : f32
    %33 = vector.broadcast %32 : f32 to vector<1x32xf32>
    %34 = arith.mulf %27, %33 : vector<1x32xf32>
    %c1 = arith.constant 1 : index
    %c0_15 = arith.constant 0 : index
    %35 = vector.load %arg8[%c1, %c0_15] : memref<8x32xf32, #tpu.memory_space<vmem>>, vector<1x32xf32>
    tpu.vector_store %arg8[%c1, %c0_15], %34 {strides = array<i32>} : memref<8x32xf32, #tpu.memory_space<vmem>>, vector<1x32xf32>,
    %c8_i32_16 = arith.constant 8 : i32
    %36 = arith.muli %arg0, %c8_i32_16 : i32
    %c2_i32 = arith.constant 2 : i32
    %37 = arith.addi %36, %c2_i32 : i32
    %38 = arith.index_cast %37 : i32 to index
    %39 = memref.load %arg2[%38] : memref<8xi32, #tpu.memory_space<smem>>
    %40 = arith.index_cast %37 : i32 to index
    %41 = memref.load %arg3[%40] : memref<8xi32, #tpu.memory_space<smem>>
    %cst_17 = arith.constant 0.000000e+00 : f32
    %42 = vector.broadcast %cst_17 : f32 to vector<1x32xf32>
    %c0_i32_18 = arith.constant 0 : i32
    %43 = arith.subi %41, %c0_i32_18 : i32
    %44 = arith.addi %c0_i32_18, %43 : i32
    %c1_i32_19 = arith.constant 1 : i32
    %45 = scf.for %arg9 = %c0_i32_18 to %44 step %c1_i32_19 iter_args(%arg10 = %42) -> (vector<1x32xf32>)  : i32 {
      %152 = arith.addi %39, %arg9 : i32
      %153 = arith.index_cast %152 : i32 to index
      %154 = memref.load %arg1[%153] : memref<14xi32, #tpu.memory_space<smem>>
      %155 = arith.index_cast %154 : i32 to index
      %c0_79 = arith.constant 0 : index
      %156 = vector.load %arg4[%155, %c0_79] : memref<16x32xf32, #tpu.memory_space<vmem>>, vector<1x32xf32>
      %157 = arith.addf %arg10, %156 : vector<1x32xf32>
      scf.yield %157 : vector<1x32xf32>
    }
    %c0_i32_20 = arith.constant 0 : i32
    %46 = arith.cmpi sgt, %41, %c0_i32_20 : i32
    %47 = arith.sitofp %41 : i32 to f32
    %cst_21 = arith.constant 1.000000e+00 : f32
    %48 = arith.maximumf %47, %cst_21 : f32
    %cst_22 = arith.constant 1.000000e+00 : f32
    %49 = arith.divf %cst_22, %48 : f32
    %cst_23 = arith.constant 0.000000e+00 : f32
    %50 = arith.select %46, %49, %cst_23 : f32
    %51 = vector.broadcast %50 : f32 to vector<1x32xf32>
    %52 = arith.mulf %45, %51 : vector<1x32xf32>
    %c2 = arith.constant 2 : index
    %c0_24 = arith.constant 0 : index
    %53 = vector.load %arg8[%c2, %c0_24] : memref<8x32xf32, #tpu.memory_space<vmem>>, vector<1x32xf32>
    tpu.vector_store %arg8[%c2, %c0_24], %52 {strides = array<i32>} : memref<8x32xf32, #tpu.memory_space<vmem>>, vector<1x32xf32>,
    %c8_i32_25 = arith.constant 8 : i32
    %54 = arith.muli %arg0, %c8_i32_25 : i32
    %c3_i32 = arith.constant 3 : i32
    %55 = arith.addi %54, %c3_i32 : i32
    %56 = arith.index_cast %55 : i32 to index
    %57 = memref.load %arg2[%56] : memref<8xi32, #tpu.memory_space<smem>>
    %58 = arith.index_cast %55 : i32 to index
    %59 = memref.load %arg3[%58] : memref<8xi32, #tpu.memory_space<smem>>
    %cst_26 = arith.constant 0.000000e+00 : f32
    %60 = vector.broadcast %cst_26 : f32 to vector<1x32xf32>
    %c0_i32_27 = arith.constant 0 : i32
    %61 = arith.subi %59, %c0_i32_27 : i32
    %62 = arith.addi %c0_i32_27, %61 : i32
    %c1_i32_28 = arith.constant 1 : i32
    %63 = scf.for %arg9 = %c0_i32_27 to %62 step %c1_i32_28 iter_args(%arg10 = %60) -> (vector<1x32xf32>)  : i32 {
      %152 = arith.addi %57, %arg9 : i32
      %153 = arith.index_cast %152 : i32 to index
      %154 = memref.load %arg1[%153] : memref<14xi32, #tpu.memory_space<smem>>
      %155 = arith.index_cast %154 : i32 to index
      %c0_79 = arith.constant 0 : index
      %156 = vector.load %arg4[%155, %c0_79] : memref<16x32xf32, #tpu.memory_space<vmem>>, vector<1x32xf32>
      %157 = arith.addf %arg10, %156 : vector<1x32xf32>
      scf.yield %157 : vector<1x32xf32>
    }
    %c0_i32_29 = arith.constant 0 : i32
    %64 = arith.cmpi sgt, %59, %c0_i32_29 : i32
    %65 = arith.sitofp %59 : i32 to f32
    %cst_30 = arith.constant 1.000000e+00 : f32
    %66 = arith.maximumf %65, %cst_30 : f32
    %cst_31 = arith.constant 1.000000e+00 : f32
    %67 = arith.divf %cst_31, %66 : f32
    %cst_32 = arith.constant 0.000000e+00 : f32
    %68 = arith.select %64, %67, %cst_32 : f32
    %69 = vector.broadcast %68 : f32 to vector<1x32xf32>
    %70 = arith.mulf %63, %69 : vector<1x32xf32>
    %c3 = arith.constant 3 : index
    %c0_33 = arith.constant 0 : index
    %71 = vector.load %arg8[%c3, %c0_33] : memref<8x32xf32, #tpu.memory_space<vmem>>, vector<1x32xf32>
    tpu.vector_store %arg8[%c3, %c0_33], %70 {strides = array<i32>} : memref<8x32xf32, #tpu.memory_space<vmem>>, vector<1x32xf32>,
    %c8_i32_34 = arith.constant 8 : i32
    %72 = arith.muli %arg0, %c8_i32_34 : i32
    %c4_i32 = arith.constant 4 : i32
    %73 = arith.addi %72, %c4_i32 : i32
    %74 = arith.index_cast %73 : i32 to index
    %75 = memref.load %arg2[%74] : memref<8xi32, #tpu.memory_space<smem>>
    %76 = arith.index_cast %73 : i32 to index
    %77 = memref.load %arg3[%76] : memref<8xi32, #tpu.memory_space<smem>>
    %cst_35 = arith.constant 0.000000e+00 : f32
    %78 = vector.broadcast %cst_35 : f32 to vector<1x32xf32>
    %c0_i32_36 = arith.constant 0 : i32
    %79 = arith.subi %77, %c0_i32_36 : i32
    %80 = arith.addi %c0_i32_36, %79 : i32
    %c1_i32_37 = arith.constant 1 : i32
    %81 = scf.for %arg9 = %c0_i32_36 to %80 step %c1_i32_37 iter_args(%arg10 = %78) -> (vector<1x32xf32>)  : i32 {
      %152 = arith.addi %75, %arg9 : i32
      %153 = arith.index_cast %152 : i32 to index
      %154 = memref.load %arg1[%153] : memref<14xi32, #tpu.memory_space<smem>>
      %155 = arith.index_cast %154 : i32 to index
      %c0_79 = arith.constant 0 : index
      %156 = vector.load %arg4[%155, %c0_79] : memref<16x32xf32, #tpu.memory_space<vmem>>, vector<1x32xf32>
      %157 = arith.addf %arg10, %156 : vector<1x32xf32>
      scf.yield %157 : vector<1x32xf32>
    }
    %c0_i32_38 = arith.constant 0 : i32
    %82 = arith.cmpi sgt, %77, %c0_i32_38 : i32
    %83 = arith.sitofp %77 : i32 to f32
    %cst_39 = arith.constant 1.000000e+00 : f32
    %84 = arith.maximumf %83, %cst_39 : f32
    %cst_40 = arith.constant 1.000000e+00 : f32
    %85 = arith.divf %cst_40, %84 : f32
    %cst_41 = arith.constant 0.000000e+00 : f32
    %86 = arith.select %82, %85, %cst_41 : f32
    %87 = vector.broadcast %86 : f32 to vector<1x32xf32>
    %88 = arith.mulf %81, %87 : vector<1x32xf32>
    %c4 = arith.constant 4 : index
    %c0_42 = arith.constant 0 : index
    %89 = vector.load %arg8[%c4, %c0_42] : memref<8x32xf32, #tpu.memory_space<vmem>>, vector<1x32xf32>
    tpu.vector_store %arg8[%c4, %c0_42], %88 {strides = array<i32>} : memref<8x32xf32, #tpu.memory_space<vmem>>, vector<1x32xf32>,
    %c8_i32_43 = arith.constant 8 : i32
    %90 = arith.muli %arg0, %c8_i32_43 : i32
    %c5_i32 = arith.constant 5 : i32
    %91 = arith.addi %90, %c5_i32 : i32
    %92 = arith.index_cast %91 : i32 to index
    %93 = memref.load %arg2[%92] : memref<8xi32, #tpu.memory_space<smem>>
    %94 = arith.index_cast %91 : i32 to index
    %95 = memref.load %arg3[%94] : memref<8xi32, #tpu.memory_space<smem>>
    %cst_44 = arith.constant 0.000000e+00 : f32
    %96 = vector.broadcast %cst_44 : f32 to vector<1x32xf32>
    %c0_i32_45 = arith.constant 0 : i32
    %97 = arith.subi %95, %c0_i32_45 : i32
    %98 = arith.addi %c0_i32_45, %97 : i32
    %c1_i32_46 = arith.constant 1 : i32
    %99 = scf.for %arg9 = %c0_i32_45 to %98 step %c1_i32_46 iter_args(%arg10 = %96) -> (vector<1x32xf32>)  : i32 {
      %152 = arith.addi %93, %arg9 : i32
      %153 = arith.index_cast %152 : i32 to index
      %154 = memref.load %arg1[%153] : memref<14xi32, #tpu.memory_space<smem>>
      %155 = arith.index_cast %154 : i32 to index
      %c0_79 = arith.constant 0 : index
      %156 = vector.load %arg4[%155, %c0_79] : memref<16x32xf32, #tpu.memory_space<vmem>>, vector<1x32xf32>
      %157 = arith.addf %arg10, %156 : vector<1x32xf32>
      scf.yield %157 : vector<1x32xf32>
    }
    %c0_i32_47 = arith.constant 0 : i32
    %100 = arith.cmpi sgt, %95, %c0_i32_47 : i32
    %101 = arith.sitofp %95 : i32 to f32
    %cst_48 = arith.constant 1.000000e+00 : f32
    %102 = arith.maximumf %101, %cst_48 : f32
    %cst_49 = arith.constant 1.000000e+00 : f32
    %103 = arith.divf %cst_49, %102 : f32
    %cst_50 = arith.constant 0.000000e+00 : f32
    %104 = arith.select %100, %103, %cst_50 : f32
    %105 = vector.broadcast %104 : f32 to vector<1x32xf32>
    %106 = arith.mulf %99, %105 : vector<1x32xf32>
    %c5 = arith.constant 5 : index
    %c0_51 = arith.constant 0 : index
    %107 = vector.load %arg8[%c5, %c0_51] : memref<8x32xf32, #tpu.memory_space<vmem>>, vector<1x32xf32>
    tpu.vector_store %arg8[%c5, %c0_51], %106 {strides = array<i32>} : memref<8x32xf32, #tpu.memory_space<vmem>>, vector<1x32xf32>,
    %c8_i32_52 = arith.constant 8 : i32
    %108 = arith.muli %arg0, %c8_i32_52 : i32
    %c6_i32 = arith.constant 6 : i32
    %109 = arith.addi %108, %c6_i32 : i32
    %110 = arith.index_cast %109 : i32 to index
    %111 = memref.load %arg2[%110] : memref<8xi32, #tpu.memory_space<smem>>
    %112 = arith.index_cast %109 : i32 to index
    %113 = memref.load %arg3[%112] : memref<8xi32, #tpu.memory_space<smem>>
    %cst_53 = arith.constant 0.000000e+00 : f32
    %114 = vector.broadcast %cst_53 : f32 to vector<1x32xf32>
    %c0_i32_54 = arith.constant 0 : i32
    %115 = arith.subi %113, %c0_i32_54 : i32
    %116 = arith.addi %c0_i32_54, %115 : i32
    %c1_i32_55 = arith.constant 1 : i32
    %117 = scf.for %arg9 = %c0_i32_54 to %116 step %c1_i32_55 iter_args(%arg10 = %114) -> (vector<1x32xf32>)  : i32 {
      %152 = arith.addi %111, %arg9 : i32
      %153 = arith.index_cast %152 : i32 to index
      %154 = memref.load %arg1[%153] : memref<14xi32, #tpu.memory_space<smem>>
      %155 = arith.index_cast %154 : i32 to index
      %c0_79 = arith.constant 0 : index
      %156 = vector.load %arg4[%155, %c0_79] : memref<16x32xf32, #tpu.memory_space<vmem>>, vector<1x32xf32>
      %157 = arith.addf %arg10, %156 : vector<1x32xf32>
      scf.yield %157 : vector<1x32xf32>
    }
    %c0_i32_56 = arith.constant 0 : i32
    %118 = arith.cmpi sgt, %113, %c0_i32_56 : i32
    %119 = arith.sitofp %113 : i32 to f32
    %cst_57 = arith.constant 1.000000e+00 : f32
    %120 = arith.maximumf %119, %cst_57 : f32
    %cst_58 = arith.constant 1.000000e+00 : f32
    %121 = arith.divf %cst_58, %120 : f32
    %cst_59 = arith.constant 0.000000e+00 : f32
    %122 = arith.select %118, %121, %cst_59 : f32
    %123 = vector.broadcast %122 : f32 to vector<1x32xf32>
    %124 = arith.mulf %117, %123 : vector<1x32xf32>
    %c6 = arith.constant 6 : index
    %c0_60 = arith.constant 0 : index
    %125 = vector.load %arg8[%c6, %c0_60] : memref<8x32xf32, #tpu.memory_space<vmem>>, vector<1x32xf32>
    tpu.vector_store %arg8[%c6, %c0_60], %124 {strides = array<i32>} : memref<8x32xf32, #tpu.memory_space<vmem>>, vector<1x32xf32>,
    %c8_i32_61 = arith.constant 8 : i32
    %126 = arith.muli %arg0, %c8_i32_61 : i32
    %c7_i32 = arith.constant 7 : i32
    %127 = arith.addi %126, %c7_i32 : i32
    %128 = arith.index_cast %127 : i32 to index
    %129 = memref.load %arg2[%128] : memref<8xi32, #tpu.memory_space<smem>>
    %130 = arith.index_cast %127 : i32 to index
    %131 = memref.load %arg3[%130] : memref<8xi32, #tpu.memory_space<smem>>
    %cst_62 = arith.constant 0.000000e+00 : f32
    %132 = vector.broadcast %cst_62 : f32 to vector<1x32xf32>
    %c0_i32_63 = arith.constant 0 : i32
    %133 = arith.subi %131, %c0_i32_63 : i32
    %134 = arith.addi %c0_i32_63, %133 : i32
    %c1_i32_64 = arith.constant 1 : i32
    %135 = scf.for %arg9 = %c0_i32_63 to %134 step %c1_i32_64 iter_args(%arg10 = %132) -> (vector<1x32xf32>)  : i32 {
      %152 = arith.addi %129, %arg9 : i32
      %153 = arith.index_cast %152 : i32 to index
      %154 = memref.load %arg1[%153] : memref<14xi32, #tpu.memory_space<smem>>
      %155 = arith.index_cast %154 : i32 to index
      %c0_79 = arith.constant 0 : index
      %156 = vector.load %arg4[%155, %c0_79] : memref<16x32xf32, #tpu.memory_space<vmem>>, vector<1x32xf32>
      %157 = arith.addf %arg10, %156 : vector<1x32xf32>
      scf.yield %157 : vector<1x32xf32>
    }
    %c0_i32_65 = arith.constant 0 : i32
    %136 = arith.cmpi sgt, %131, %c0_i32_65 : i32
    %137 = arith.sitofp %131 : i32 to f32
    %cst_66 = arith.constant 1.000000e+00 : f32
    %138 = arith.maximumf %137, %cst_66 : f32
    %cst_67 = arith.constant 1.000000e+00 : f32
    %139 = arith.divf %cst_67, %138 : f32
    %cst_68 = arith.constant 0.000000e+00 : f32
    %140 = arith.select %136, %139, %cst_68 : f32
    %141 = vector.broadcast %140 : f32 to vector<1x32xf32>
    %142 = arith.mulf %135, %141 : vector<1x32xf32>
    %c7 = arith.constant 7 : index
    %c0_69 = arith.constant 0 : index
    %143 = vector.load %arg8[%c7, %c0_69] : memref<8x32xf32, #tpu.memory_space<vmem>>, vector<1x32xf32>
    tpu.vector_store %arg8[%c7, %c0_69], %142 {strides = array<i32>} : memref<8x32xf32, #tpu.memory_space<vmem>>, vector<1x32xf32>,
    %c0_70 = arith.constant 0 : index
    %c0_71 = arith.constant 0 : index
    %144 = vector.load %arg8[%c0_70, %c0_71] : memref<8x32xf32, #tpu.memory_space<vmem>>, vector<8x32xf32>
    %c0_72 = arith.constant 0 : index
    %c0_73 = arith.constant 0 : index
    %145 = vector.load %arg5[%c0_72, %c0_73] : memref<32x32xf32, #tpu.memory_space<vmem>>, vector<32x32xf32>
    %cst_74 = arith.constant dense<0.000000e+00> : vector<8x32xf32>
    %146 = tpu.matmul %144, %145, %cst_74 {dimension_numbers = #tpu.dot_dimension_numbers<[1], [0], [0], [1], [0, 0, 1, 1], [], []>} : vector<8x32xf32>, vector<32x32xf32>, vector<8x32xf32> -> vector<8x32xf32>
    %c0_75 = arith.constant 0 : index
    %c0_76 = arith.constant 0 : index
    %147 = vector.load %arg6[%c0_75, %c0_76] : memref<1x32xf32, #tpu.memory_space<vmem>>, vector<1x32xf32>
    %148 = vector.broadcast %147 : vector<1x32xf32> to vector<8x32xf32>
    %149 = arith.addf %146, %148 : vector<8x32xf32>
    %150 = math.tanh %149 : vector<8x32xf32>
    %c0_77 = arith.constant 0 : index
    %c0_78 = arith.constant 0 : index
    %151 = vector.load %arg7[%c0_77, %c0_78] : memref<8x32xf32, #tpu.memory_space<vmem>>, vector<8x32xf32>
    tpu.vector_store %arg7[%c0_77, %c0_78], %150 {strides = array<i32>} : memref<8x32xf32, #tpu.memory_space<vmem>>, vector<8x32xf32>,
    return
  }
  func.func @transform_0(%arg0: i32, %arg1: memref<14xi32, #tpu.memory_space<smem>>, %arg2: memref<8xi32, #tpu.memory_space<smem>>, %arg3: memref<8xi32, #tpu.memory_space<smem>>) -> (i32, i32) {
    %c0_i32 = arith.constant 0 : i32
    %c0_i32_0 = arith.constant 0 : i32
    %c0_i32_1 = arith.constant 0 : i32
    return %c0_i32, %c0_i32_0 : i32, i32
  }
  func.func @transform_1(%arg0: i32, %arg1: memref<14xi32, #tpu.memory_space<smem>>, %arg2: memref<8xi32, #tpu.memory_space<smem>>, %arg3: memref<8xi32, #tpu.memory_space<smem>>) -> (i32, i32) {
    %c0_i32 = arith.constant 0 : i32
    %c0_i32_0 = arith.constant 0 : i32
    %c0_i32_1 = arith.constant 0 : i32
    return %c0_i32, %c0_i32_0 : i32, i32
  }
  func.func @transform_2(%arg0: i32, %arg1: memref<14xi32, #tpu.memory_space<smem>>, %arg2: memref<8xi32, #tpu.memory_space<smem>>, %arg3: memref<8xi32, #tpu.memory_space<smem>>) -> (i32, i32) {
    %c0_i32 = arith.constant 0 : i32
    %c0_i32_0 = arith.constant 0 : i32
    %c0_i32_1 = arith.constant 0 : i32
    return %c0_i32, %c0_i32_0 : i32, i32
  }
  func.func @transform_3(%arg0: i32, %arg1: memref<14xi32, #tpu.memory_space<smem>>, %arg2: memref<8xi32, #tpu.memory_space<smem>>, %arg3: memref<8xi32, #tpu.memory_space<smem>>) -> (i32, i32) {
    %c0_i32 = arith.constant 0 : i32
    %c0_i32_0 = arith.constant 0 : i32
    return %arg0, %c0_i32 : i32, i32
  }
}

</mosaic_0001>

<llo_original>
// kernel: tpu_custom_call.1
$region0: #{tpu_custom_call.1}
  #allocation0 [shape = 'u32[]', space=smem, size = 0x4, offset = 0x4, fixed_abs, tag = 'smem constant byte address 0x4 - core index']
  #allocation1 [shape = 'u32[144,128]{1,0:T(1,128)}', space=vmem, size = 0x12000, scoped, tag = 'internal scratch']
  #allocation2 [shape = 'f32[8,32]{1,0:T(8,128)}', space=vmem, size = 0x1000, scoped, tag = 'scratch operand']
  #allocation3 [shape = 's32[1]{0}', space=sflag, size = 0x4, scoped, tag = 'scoped memory for tpu_custom_call.1']
  #allocation4 [shape = 'u8[512]{0}', space=smem, size = 0x200, scoped, tag = 'prefetched SMEM operand 0']
  #allocation5 [shape = 'u8[512]{0}', space=smem, size = 0x200, scoped, tag = 'prefetched SMEM operand 1']
  #allocation6 [shape = 'u8[512]{0}', space=smem, size = 0x200, scoped, tag = 'prefetched SMEM operand 2']
  %s0 = inlined_call_operand.hbm [shape: s32[14], index: 0, kind: input, shape index: {}]
  %s1 = inlined_call_operand.vmem [shape: s32[8], index: 1, kind: input, shape index: {}]
  %s2 = inlined_call_operand.vmem [shape: s32[8], index: 2, kind: input, shape index: {}]
  %s3 = inlined_call_operand.hbm [shape: f32[16,32], index: 3, kind: input, shape index: {}]
  %s4 = inlined_call_operand.hbm [shape: f32[32,32], index: 4, kind: input, shape index: {}]
  %s5 = inlined_call_operand.vmem [shape: f32[1,32], index: 5, kind: input, shape index: {}]
  %s6 = inlined_call_operand.hbm [shape: f32[8,32], index: 6, kind: output, shape index: {}]
  %s7 = sld [smem:[#allocation0]]
  $region86: #{tpu_custom_call.1} parent=0
    _
  %s9 = ssub.s32 1, %s7
  %s10 = scalar_select 0, %s9, %s7
  %12 = dma.hbm_to_smem %s0, 16, [#allocation4], [#allocation3]
  %s13 = sshll.u32 %s1, 4
  %s14 = int_to_ptr.vmem [resolvable:$true] %s13
  %16 = dma.vmem_to_smem %s14, 16, [#allocation5], [#allocation3]
  %s17 = sshll.u32 %s2, 4
  %s18 = int_to_ptr.vmem [resolvable:$true] %s17
  %20 = dma.vmem_to_smem %s18, 16, [#allocation6], [#allocation3]
  %21 = dma.done [#allocation3], 48
  %22 = sfence
  $region1: #{tpu_custom_call.1} parent=0
    #allocation7 [shape = 'u8[8192]{0}', space=vmem, size = 0x2000, scoped, tag = 'input window, operand 3, single buffered']
    #allocation8 [shape = 's32[1]{0}', space=sflag, size = 0x4, scoped, tag = 'scoped memory for tpu_custom_call.1']
    #allocation9 [shape = 's32[1]{0}', space=sflag, size = 0x4, scoped, tag = 'scoped memory for tpu_custom_call.1']
    #allocation10 [shape = 'u8[16384]{0}', space=vmem, size = 0x4000, scoped, tag = 'input window, operand 4, single buffered']
    #allocation11 [shape = 's32[1]{0}', space=sflag, size = 0x4, scoped, tag = 'scoped memory for tpu_custom_call.1']
    #allocation12 [shape = 'u8[4096]{0}', space=vmem, size = 0x1000, scoped, tag = 'output window, operand 0, single buffered']
    %23 = vsyncpa [#allocation8], 0
    %24 = vsyncpa [#allocation11], 0
    %25 = vsyncpa [#allocation9], 0
    // Predicated region
    $region2: #{tpu_custom_call.1} parent=1 // pred_check
      _
    $region3: #{tpu_custom_call.1} parent=1 // pred_check_branch
      %27 = sbr.rel (0) target = $region5
    $region4: #{tpu_custom_call.1} parent=1 // pred_region
      %s29 = ssub.s32 256, 256
      %30 = vsyncadd [#allocation8], %s29
      %s31 = sshll.u32 [#allocation7], 4
      %s32 = int_to_ptr.vmem [resolvable:$true] %s31
      %37 = dma.hbm_to_vmem [thread:$0]  %s3, 256, %s32, [#allocation8], 128, 128, 8
    $region5: #{tpu_custom_call.1} parent=1 // pred_fallthru
      _
    // Predicated region
    $region6: #{tpu_custom_call.1} parent=1 // pred_check
      _
    $region7: #{tpu_custom_call.1} parent=1 // pred_check_branch
      %39 = sbr.rel (0) target = $region9
    $region8: #{tpu_custom_call.1} parent=1 // pred_region
      %s41 = ssub.s32 512, 512
      %42 = vsyncadd [#allocation11], %s41
      %s43 = sshll.u32 [#allocation10], 4
      %s44 = int_to_ptr.vmem [resolvable:$true] %s43
      %49 = dma.hbm_to_vmem [thread:$0]  %s4, 512, %s44, [#allocation11], 128, 128, 8
    $region9: #{tpu_custom_call.1} parent=1 // pred_fallthru
      _
    // Predicated region
    $region10: #{tpu_custom_call.1} parent=1 // pred_check
      _
    $region11: #{tpu_custom_call.1} parent=1 // pred_check_branch
      %51 = sbr.rel (0) target = $region13
    $region12: #{tpu_custom_call.1} parent=1 // pred_region
      _
    $region13: #{tpu_custom_call.1} parent=1 // pred_fallthru
      _
    // Predicated region
    $region14: #{tpu_custom_call.1} parent=1 // pred_check
      _
    $region15: #{tpu_custom_call.1} parent=1 // pred_check_branch
      %53 = sbr.rel (0) target = $region17
    $region16: #{tpu_custom_call.1} parent=1 // pred_region
      %54 = dma.done [#allocation8], 256
    $region17: #{tpu_custom_call.1} parent=1 // pred_fallthru
      _
    // Predicated region
    $region18: #{tpu_custom_call.1} parent=1 // pred_check
      _
    $region19: #{tpu_custom_call.1} parent=1 // pred_check_branch
      %56 = sbr.rel (0) target = $region21
    $region20: #{tpu_custom_call.1} parent=1 // pred_region
      %57 = dma.done [#allocation11], 512
    $region21: #{tpu_custom_call.1} parent=1 // pred_fallthru
      _
    %s58 = smul.u32 0, 8
    %s59 = sld [smem:[#allocation5 + %s58]]
    %s60 = sld [smem:[#allocation6 + %s58]]
    // While loop
    $region22: #{tpu_custom_call.1} parent=1 // loop_pre_header
      _
    $region23: #{tpu_custom_call.1} parent=1 // loop_header
      %s62 = sphi 0, %s64
      %p63 = scmp.ge.s32.totalorder %s62, %s60
      %v67 = vphi 0.0, %v72
    $region24: #{tpu_custom_call.1} parent=1 // loop_header_branch
      %66 = sbr.rel (%p63) target = $region28
    $region25: #{tpu_custom_call.1} parent=1 // loop_body
      %s68 = sadd.s32 %s59, %s62
      %s69 = sld [smem:[#allocation4 + %s68]]
      %s70 = scalar_lea.vmem [#allocation7], %s69
      %v71 = vld [vmem:[%s70] sm:$0x1]
      %v72 = vadd.f32 %v67, %v71
    $region26: #{tpu_custom_call.1} parent=1 // loop_footer
      %s64 = sadd.s32 %s62, 1
    $region27: #{tpu_custom_call.1} parent=1 // loop_footer_branch
      %61 = sbr.rel target = $region23
    $region28: #{tpu_custom_call.1} parent=1 // loop_exit
      _
    %p73 = scmp.gt.s32.totalorder %s60, 0
    %s74 = scvt.s32.f32 %s60
    %s75 = smax.f32 %s74, 1.0
    %v76 = vstv %s75
    %v77 = vrcp.pop %v76
    %s78 = vtos %v77
    %s79 = scalar_select %p73, %s78, 0.0
    %v80 = vstv %s79
    %v81 = vmul.f32 %v67, %v80
    %vm82 = vcmask 253952
    %83 = vst.msk [vmem:[#allocation2] sm:$0x1] %vm82, %v81
    %s84 = sadd.s32 %s58, 1
    %s85 = sld [smem:[#allocation5 + %s84]]
    %s86 = sld [smem:[#allocation6 + %s84]]
    // While loop
    $region29: #{tpu_custom_call.1} parent=1 // loop_pre_header
      _
    $region30: #{tpu_custom_call.1} parent=1 // loop_header
      %s88 = sphi 0, %s90
      %p89 = scmp.ge.s32.totalorder %s88, %s86
      %v93 = vphi 0.0, %v98
    $region31: #{tpu_custom_call.1} parent=1 // loop_header_branch
      %92 = sbr.rel (%p89) target = $region35
    $region32: #{tpu_custom_call.1} parent=1 // loop_body
      %s94 = sadd.s32 %s85, %s88
      %s95 = sld [smem:[#allocation4 + %s94]]
      %s96 = scalar_lea.vmem [#allocation7], %s95
      %v97 = vld [vmem:[%s96] sm:$0x1]
      %v98 = vadd.f32 %v93, %v97
    $region33: #{tpu_custom_call.1} parent=1 // loop_footer
      %s90 = sadd.s32 %s88, 1
    $region34: #{tpu_custom_call.1} parent=1 // loop_footer_branch
      %87 = sbr.rel target = $region30
    $region35: #{tpu_custom_call.1} parent=1 // loop_exit
      _
    %p99 = scmp.gt.s32.totalorder %s86, 0
    %s100 = scvt.s32.f32 %s86
    %s101 = smax.f32 %s100, 1.0
    %v102 = vstv %s101
    %v103 = vrcp.pop %v102
    %s104 = vtos %v103
    %s105 = scalar_select %p99, %s104, 0.0
    %v106 = vstv %s105
    %v107 = vmul.f32 %v93, %v106
    %108 = vst.msk [vmem:[#allocation2 + $0x1] sm:$0x1] %vm82, %v107
    %s109 = sadd.s32 %s58, 2
    %s110 = sld [smem:[#allocation5 + %s109]]
    %s111 = sld [smem:[#allocation6 + %s109]]
    // While loop
    $region36: #{tpu_custom_call.1} parent=1 // loop_pre_header
      _
    $region37: #{tpu_custom_call.1} parent=1 // loop_header
      %s113 = sphi 0, %s115
      %p114 = scmp.ge.s32.totalorder %s113, %s111
      %v118 = vphi 0.0, %v123
    $region38: #{tpu_custom_call.1} parent=1 // loop_header_branch
      %117 = sbr.rel (%p114) target = $region42
    $region39: #{tpu_custom_call.1} parent=1 // loop_body
      %s119 = sadd.s32 %s110, %s113
      %s120 = sld [smem:[#allocation4 + %s119]]
      %s121 = scalar_lea.vmem [#allocation7], %s120
      %v122 = vld [vmem:[%s121] sm:$0x1]
      %v123 = vadd.f32 %v118, %v122
    $region40: #{tpu_custom_call.1} parent=1 // loop_footer
      %s115 = sadd.s32 %s113, 1
    $region41: #{tpu_custom_call.1} parent=1 // loop_footer_branch
      %112 = sbr.rel target = $region37
    $region42: #{tpu_custom_call.1} parent=1 // loop_exit
      _
    %p124 = scmp.gt.s32.totalorder %s111, 0
    %s125 = scvt.s32.f32 %s111
    %s126 = smax.f32 %s125, 1.0
    %v127 = vstv %s126
    %v128 = vrcp.pop %v127
    %s129 = vtos %v128
    %s130 = scalar_select %p124, %s129, 0.0
    %v131 = vstv %s130
    %v132 = vmul.f32 %v118, %v131
    %133 = vst.msk [vmem:[#allocation2 + $0x2] sm:$0x1] %vm82, %v132
    %s134 = sadd.s32 %s58, 3
    %s135 = sld [smem:[#allocation5 + %s134]]
    %s136 = sld [smem:[#allocation6 + %s134]]
    // While loop
    $region43: #{tpu_custom_call.1} parent=1 // loop_pre_header
      _
    $region44: #{tpu_custom_call.1} parent=1 // loop_header
      %s138 = sphi 0, %s140
      %p139 = scmp.ge.s32.totalorder %s138, %s136
      %v143 = vphi 0.0, %v148
    $region45: #{tpu_custom_call.1} parent=1 // loop_header_branch
      %142 = sbr.rel (%p139) target = $region49
    $region46: #{tpu_custom_call.1} parent=1 // loop_body
      %s144 = sadd.s32 %s135, %s138
      %s145 = sld [smem:[#allocation4 + %s144]]
      %s146 = scalar_lea.vmem [#allocation7], %s145
      %v147 = vld [vmem:[%s146] sm:$0x1]
      %v148 = vadd.f32 %v143, %v147
    $region47: #{tpu_custom_call.1} parent=1 // loop_footer
      %s140 = sadd.s32 %s138, 1
    $region48: #{tpu_custom_call.1} parent=1 // loop_footer_branch
      %137 = sbr.rel target = $region44
    $region49: #{tpu_custom_call.1} parent=1 // loop_exit
      _
    %p149 = scmp.gt.s32.totalorder %s136, 0
    %s150 = scvt.s32.f32 %s136
    %s151 = smax.f32 %s150, 1.0
    %v152 = vstv %s151
    %v153 = vrcp.pop %v152
    %s154 = vtos %v153
    %s155 = scalar_select %p149, %s154, 0.0
    %v156 = vstv %s155
    %v157 = vmul.f32 %v143, %v156
    %158 = vst.msk [vmem:[#allocation2 + $0x3] sm:$0x1] %vm82, %v157
    %s159 = sadd.s32 %s58, 4
    %s160 = sld [smem:[#allocation5 + %s159]]
    %s161 = sld [smem:[#allocation6 + %s159]]
    // While loop
    $region50: #{tpu_custom_call.1} parent=1 // loop_pre_header
      _
    $region51: #{tpu_custom_call.1} parent=1 // loop_header
      %s163 = sphi 0, %s165
      %p164 = scmp.ge.s32.totalorder %s163, %s161
      %v168 = vphi 0.0, %v173
    $region52: #{tpu_custom_call.1} parent=1 // loop_header_branch
      %167 = sbr.rel (%p164) target = $region56
    $region53: #{tpu_custom_call.1} parent=1 // loop_body
      %s169 = sadd.s32 %s160, %s163
      %s170 = sld [smem:[#allocation4 + %s169]]
      %s171 = scalar_lea.vmem [#allocation7], %s170
      %v172 = vld [vmem:[%s171] sm:$0x1]
      %v173 = vadd.f32 %v168, %v172
    $region54: #{tpu_custom_call.1} parent=1 // loop_footer
      %s165 = sadd.s32 %s163, 1
    $region55: #{tpu_custom_call.1} parent=1 // loop_footer_branch
      %162 = sbr.rel target = $region51
    $region56: #{tpu_custom_call.1} parent=1 // loop_exit
      _
    %p174 = scmp.gt.s32.totalorder %s161, 0
    %s175 = scvt.s32.f32 %s161
    %s176 = smax.f32 %s175, 1.0
    %v177 = vstv %s176
    %v178 = vrcp.pop %v177
    %s179 = vtos %v178
    %s180 = scalar_select %p174, %s179, 0.0
    %v181 = vstv %s180
    %v182 = vmul.f32 %v168, %v181
    %183 = vst.msk [vmem:[#allocation2 + $0x4] sm:$0x1] %vm82, %v182
    %s184 = sadd.s32 %s58, 5
    %s185 = sld [smem:[#allocation5 + %s184]]
    %s186 = sld [smem:[#allocation6 + %s184]]
    // While loop
    $region57: #{tpu_custom_call.1} parent=1 // loop_pre_header
      _
    $region58: #{tpu_custom_call.1} parent=1 // loop_header
      %s188 = sphi 0, %s190
      %p189 = scmp.ge.s32.totalorder %s188, %s186
      %v193 = vphi 0.0, %v198
    $region59: #{tpu_custom_call.1} parent=1 // loop_header_branch
      %192 = sbr.rel (%p189) target = $region63
    $region60: #{tpu_custom_call.1} parent=1 // loop_body
      %s194 = sadd.s32 %s185, %s188
      %s195 = sld [smem:[#allocation4 + %s194]]
      %s196 = scalar_lea.vmem [#allocation7], %s195
      %v197 = vld [vmem:[%s196] sm:$0x1]
      %v198 = vadd.f32 %v193, %v197
    $region61: #{tpu_custom_call.1} parent=1 // loop_footer
      %s190 = sadd.s32 %s188, 1
    $region62: #{tpu_custom_call.1} parent=1 // loop_footer_branch
      %187 = sbr.rel target = $region58
    $region63: #{tpu_custom_call.1} parent=1 // loop_exit
      _
    %p199 = scmp.gt.s32.totalorder %s186, 0
    %s200 = scvt.s32.f32 %s186
    %s201 = smax.f32 %s200, 1.0
    %v202 = vstv %s201
    %v203 = vrcp.pop %v202
    %s204 = vtos %v203
    %s205 = scalar_select %p199, %s204, 0.0
    %v206 = vstv %s205
    %v207 = vmul.f32 %v193, %v206
    %208 = vst.msk [vmem:[#allocation2 + $0x5] sm:$0x1] %vm82, %v207
    %s209 = sadd.s32 %s58, 6
    %s210 = sld [smem:[#allocation5 + %s209]]
    %s211 = sld [smem:[#allocation6 + %s209]]
    // While loop
    $region64: #{tpu_custom_call.1} parent=1 // loop_pre_header
      _
    $region65: #{tpu_custom_call.1} parent=1 // loop_header
      %s213 = sphi 0, %s215
      %p214 = scmp.ge.s32.totalorder %s213, %s211
      %v218 = vphi 0.0, %v223
    $region66: #{tpu_custom_call.1} parent=1 // loop_header_branch
      %217 = sbr.rel (%p214) target = $region70
    $region67: #{tpu_custom_call.1} parent=1 // loop_body
      %s219 = sadd.s32 %s210, %s213
      %s220 = sld [smem:[#allocation4 + %s219]]
      %s221 = scalar_lea.vmem [#allocation7], %s220
      %v222 = vld [vmem:[%s221] sm:$0x1]
      %v223 = vadd.f32 %v218, %v222
    $region68: #{tpu_custom_call.1} parent=1 // loop_footer
      %s215 = sadd.s32 %s213, 1
    $region69: #{tpu_custom_call.1} parent=1 // loop_footer_branch
      %212 = sbr.rel target = $region65
    $region70: #{tpu_custom_call.1} parent=1 // loop_exit
      _
    %p224 = scmp.gt.s32.totalorder %s211, 0
    %s225 = scvt.s32.f32 %s211
    %s226 = smax.f32 %s225, 1.0
    %v227 = vstv %s226
    %v228 = vrcp.pop %v227
    %s229 = vtos %v228
    %s230 = scalar_select %p224, %s229, 0.0
    %v231 = vstv %s230
    %v232 = vmul.f32 %v218, %v231
    %233 = vst.msk [vmem:[#allocation2 + $0x6] sm:$0x1] %vm82, %v232
    %s234 = sadd.s32 %s58, 7
    %s235 = sld [smem:[#allocation5 + %s234]]
    %s236 = sld [smem:[#allocation6 + %s234]]
    // While loop
    $region71: #{tpu_custom_call.1} parent=1 // loop_pre_header
      _
    $region72: #{tpu_custom_call.1} parent=1 // loop_header
      %s238 = sphi 0, %s240
      %p239 = scmp.ge.s32.totalorder %s238, %s236
      %v243 = vphi 0.0, %v248
    $region73: #{tpu_custom_call.1} parent=1 // loop_header_branch
      %242 = sbr.rel (%p239) target = $region77
    $region74: #{tpu_custom_call.1} parent=1 // loop_body
      %s244 = sadd.s32 %s235, %s238
      %s245 = sld [smem:[#allocation4 + %s244]]
      %s246 = scalar_lea.vmem [#allocation7], %s245
      %v247 = vld [vmem:[%s246] sm:$0x1]
      %v248 = vadd.f32 %v243, %v247
    $region75: #{tpu_custom_call.1} parent=1 // loop_footer
      %s240 = sadd.s32 %s238, 1
    $region76: #{tpu_custom_call.1} parent=1 // loop_footer_branch
      %237 = sbr.rel target = $region72
    $region77: #{tpu_custom_call.1} parent=1 // loop_exit
      _
    %p249 = scmp.gt.s32.totalorder %s236, 0
    %s250 = scvt.s32.f32 %s236
    %s251 = smax.f32 %s250, 1.0
    %v252 = vstv %s251
    %v253 = vrcp.pop %v252
    %s254 = vtos %v253
    %s255 = scalar_select %p249, %s254, 0.0
    %v256 = vstv %s255
    %v257 = vmul.f32 %v243, %v256
    %258 = vst.msk [vmem:[#allocation2 + $0x7] sm:$0x1] %vm82, %v257
    %v259 = vld [vmem:[#allocation2] sm:$0xff]
    %v260 = vld [vmem:[#allocation10] sm:$0xff]
    %v261 = vld [vmem:[#allocation10 + $0x8] sm:$0xff]
    %v262 = vld [vmem:[#allocation10 + $0x10] sm:$0xff]
    %v263 = vld [vmem:[#allocation10 + $0x18] sm:$0xff]
    %v264 = vld [vmem:[%s5] sm:$0x1]
    %v266 = vlaneseq
    %v267 = vshrl.u32 %v266, 7
    %v268 = vsub.s32 0, %v267
    %v269 = vrot.slane %v264, %v268
    %vm271 = vcmask 261120
    %v273 = vsel %vm271, %v259, 0
    %275 = vmatprep.subr.mxu0 0.0
    %276 = vmatpush1.msra.mxu0 0.0
    %277 = vmatprep.subr.mxu0 0.0
    %278 = vmatpush1.msra.mxu0 0.0
    %279 = vmatprep.subr.mxu0 0.0
    %280 = vmatpush1.msra.mxu0 0.0
    %281 = vmatprep.subr.mxu0 0.0
    %282 = vmatpush1.msra.mxu0 0.0
    %283 = vmatprep.subr.mxu0 0.0
    %284 = vmatpush1.msra.mxu0 0.0
    %285 = vmatprep.subr.mxu0 0.0
    %286 = vmatpush1.msra.mxu0 0.0
    %287 = vmatprep.subr.mxu0 0.0
    %288 = vmatpush1.msra.mxu0 0.0
    %289 = vmatprep.subr.mxu0 0.0
    %290 = vmatpush1.msra.mxu0 0.0
    %291 = vmatprep.subr.mxu0 0.0
    %292 = vmatpush1.msra.mxu0 0.0
    %293 = vmatprep.subr.mxu0 0.0
    %294 = vmatpush1.msra.mxu0 0.0
    %295 = vmatprep.subr.mxu0 0.0
    %296 = vmatpush1.msra.mxu0 0.0
    %297 = vmatprep.subr.mxu0 0.0
    %298 = vmatpush1.msra.mxu0 0.0
    %299 = vmatprep.subr.mxu0 0.0
    %300 = vmatpush1.msra.mxu0 %v263
    %301 = vmatprep.subr.mxu0 0.0
    %302 = vmatpush1.msra.mxu0 %v262
    %303 = vmatprep.subr.mxu0 0.0
    %304 = vmatpush1.msra.mxu0 %v261
    %305 = vmatprep.subr.mxu0 0.0
    %306 = vmatpush1.msra.mxu0 %v260
    %307 = vmatprep.subr.mxu0 0.0
    %308 = vmatpush2.msra.mxu0 0.0
    %309 = vmatprep.subr.mxu0 0.0
    %310 = vmatpush2.msra.mxu0 0.0
    %311 = vmatprep.subr.mxu0 0.0
    %312 = vmatpush2.msra.mxu0 0.0
    %313 = vmatprep.subr.mxu0 0.0
    %314 = vmatpush2.msra.mxu0 0.0
    %315 = vmatprep.subr.mxu0 0.0
    %316 = vmatpush2.msra.mxu0 0.0
    %317 = vmatprep.subr.mxu0 0.0
    %318 = vmatpush2.msra.mxu0 0.0
    %319 = vmatprep.subr.mxu0 0.0
    %320 = vmatpush2.msra.mxu0 0.0
    %321 = vmatprep.subr.mxu0 0.0
    %322 = vmatpush2.msra.mxu0 0.0
    %323 = vmatprep.subr.mxu0 0.0
    %324 = vmatpush2.msra.mxu0 0.0
    %325 = vmatprep.subr.mxu0 0.0
    %326 = vmatpush2.msra.mxu0 0.0
    %327 = vmatprep.subr.mxu0 0.0
    %328 = vmatpush2.msra.mxu0 0.0
    %329 = vmatprep.subr.mxu0 0.0
    %330 = vmatpush2.msra.mxu0 0.0
    %331 = vmatprep.subr.mxu0 0.0
    %332 = vmatpush2.msra.mxu0 0.0
    %333 = vmatprep.subr.mxu0 0.0
    %334 = vmatpush2.msra.mxu0 0.0
    %335 = vmatprep.subr.mxu0 0.0
    %336 = vmatpush2.msra.mxu0 0.0
    %337 = vmatprep.subr.mxu0 0.0
    %338 = vmatpush2.msra.mxu0 0.0
    %339 = vmatprep.mubr.f32.mxu0 0.0
    %340 = vmatmul.mubr.f32.gmra.mxu0 %v273
    %v341 = vpop.f32.mrf.mxu0
    %v342 = vadd.f32 %v269, %v341
    %v343 = vpop.f32.mrf.mxu0
    %344 = vdwg.mxu0
    %v345 = vtanh.pop %v342
    %346 = vst.msk [vmem:[#allocation12] sm:$0xff] %vm271, %v345
    // Predicated region
    $region78: #{tpu_custom_call.1} parent=1 // pred_check
      _
    $region79: #{tpu_custom_call.1} parent=1 // pred_check_branch
      %348 = sbr.rel (0) target = $region81
    $region80: #{tpu_custom_call.1} parent=1 // pred_region
      %s350 = ssub.s32 128, 128
      %351 = vsyncadd [#allocation9], %s350
      %s353 = sshll.u32 [#allocation12], 4
      %s354 = int_to_ptr.vmem [resolvable:$true] %s353
      %356 = dma.vmem_to_hbm [thread:$0]  %s354, 128, %s6, [#allocation9]
    $region81: #{tpu_custom_call.1} parent=1 // pred_fallthru
      _
    // Predicated region
    $region82: #{tpu_custom_call.1} parent=1 // pred_check
      _
    $region83: #{tpu_custom_call.1} parent=1 // pred_check_branch
      %358 = sbr.rel (0) target = $region85
    $region84: #{tpu_custom_call.1} parent=1 // pred_region
      %359 = dma.done [#allocation9], 128
    $region85: #{tpu_custom_call.1} parent=1 // pred_fallthru
      _
    %360 = vsyncpa [#allocation8], 1
    %361 = vsyncpa [#allocation11], 1
    %362 = vsyncpa [#allocation9], 1

</llo_original>
